<compile_context>
chip_gen: v6e
topology: v6e:2x2x1
jax: 0.10.0
libtpu: 0.0.40
codegen_flags: <defaults>
</compile_context>

<pallas_src>
import math
import functools

import jax
import jax.numpy as jnp
from jax.experimental import pallas as pl
from jax.experimental.pallas import tpu as pltpu


# ----------------------------------------------------------------------------
# Small helpers (plain JAX / python)
# ----------------------------------------------------------------------------
def _round_up(v, m):
    return ((v + m - 1) // m) * m


def sinusoidal_embedding(t, embedding_dim):
    """Torch-faithful f32 embedding (used only by the f32 reference)."""
    t = t.astype(jnp.float32)[:, None]
    half_dim = embedding_dim // 2
    emb_scale = math.log(10000.0) / (half_dim - 1) if half_dim > 1 else 1.0
    freq = jnp.exp(jnp.arange(half_dim, dtype=jnp.float32) * -emb_scale)
    emb = t * freq[None, :]
    emb = jnp.concatenate([jnp.sin(emb), jnp.cos(emb)], axis=1)
    if embedding_dim % 2 == 1:
        emb = jnp.pad(emb, ((0, 0), (0, 1)))
    return emb


def _normalize_conds(x, conds, cond_masks):
    if not isinstance(conds, (list, tuple)):
        conds = [conds]
    conds = list(conds)
    if cond_masks is None:
        masks = [jnp.ones(c.shape[:-1] + (1,), dtype=x.dtype) for c in conds]
    else:
        if not isinstance(cond_masks, (list, tuple)):
            cond_masks = [cond_masks]
        masks = [m[..., None] if m.ndim == conds[0].ndim - 1 else m
                 for m in cond_masks]
    return conds, masks


# ----------------------------------------------------------------------------
# Parameter construction (synthetic, torch-shaped) and one-time packing
# ----------------------------------------------------------------------------
def init_params(key, num_features, cond_dims, hidden_size, n_layers, time_dim):
    """Deterministic synthetic parameters with the module's shapes.
    Linear weights are stored [in_dim, out_dim] so kernels compute h @ W + b
    (equivalent to torch's x @ W.T)."""
    total_cond = sum(cond_dims)
    num_masks = len(cond_dims)
    input_dim = num_features + time_dim + total_cond + num_masks

    keys = jax.random.split(key, 2 * (n_layers + 1) + 2 * (n_layers - 1) + 2)
    ki = iter(keys)

    def lin(in_d, out_d):
        w = 0.05 * jax.random.normal(next(ki), (in_d, out_d), jnp.float32)
        b = 0.05 * jax.random.normal(next(ki), (out_d,), jnp.float32)
        return w, b

    params = {}
    params["Wt"], params["bt"] = lin(time_dim, time_dim)
    params["mlp"] = []
    for i in range(n_layers):
        in_d = input_dim if i == 0 else hidden_size + time_dim
        out_d = hidden_size if i < n_layers - 1 else num_features
        params["mlp"].append(lin(in_d, out_d))
    params["bn"] = []
    for _ in range(n_layers - 1):
        gamma = 1.0 + 0.1 * jax.random.normal(next(ki), (hidden_size,), jnp.float32)
        beta = 0.1 * jax.random.normal(next(ki), (hidden_size,), jnp.float32)
        params["bn"].append((gamma, beta))
    params["dims"] = dict(
        num_features=num_features, cond_dims=list(cond_dims),
        hidden_size=hidden_size, n_layers=n_layers, time_dim=time_dim,
    )
    return params


def prepare_params(params):
    """One-time packing into three VMEM slabs + static meta.

    w_slab  ((1+L)*D, D) bf16 : block 0 = time-dense weight, block 1+i = the
                                "hidden" rows of layer i (layer-0 rows
                                reordered to [x, conds, masks]).  Every block
                                is a full (D, D) tile (zero padded).
    wt_slab (D, L*D)     bf16 : the t_emb rows of every layer, stacked along
                                columns -> one matmul gives all t contributions.
    v_slab  (rows, D)    f32  : bt, freq_full, phase, biases, gammas, betas.
    """
    d = params["dims"]
    F_, T_, H_, L_ = d["num_features"], d["time_dim"], d["hidden_size"], d["n_layers"]
    cond_dims = d["cond_dims"]
    C = sum(cond_dims)
    M = len(cond_dims)
    in0 = F_ + C + M                     # layer-0 input width without t_emb
    D = _round_up(max(F_, T_, H_, in0, 1), 128)

    # ---- main weight slab -------------------------------------------------
    w_slab = jnp.zeros(((1 + L_) * D, D), jnp.float32)
    w_slab = w_slab.at[0:T_, 0:T_].set(params["Wt"])          # block 0: Wt
    for i, (W, _) in enumerate(params["mlp"]):
        if i == 0:
            # torch layer-0 input order is [x, t_emb, conds, masks];
            # keep only the non-t rows, reordered to [x, conds, masks].
            Wh = jnp.concatenate([W[:F_], W[F_ + T_:]], axis=0)
        else:
            Wh = W[:H_]
        r0 = (1 + i) * D
        w_slab = w_slab.at[r0:r0 + Wh.shape[0], 0:Wh.shape[1]].set(Wh)
    w_slab = w_slab.astype(jnp.bfloat16)

    # ---- stacked time-contribution weights ---------------------------------
    wt_slab = jnp.zeros((D, L_ * D), jnp.float32)
    for i, (W, _) in enumerate(params["mlp"]):
        Wt_i = W[F_:F_ + T_] if i == 0 else W[H_:H_ + T_]
        wt_slab = wt_slab.at[0:T_, i * D:i * D + Wt_i.shape[1]].set(Wt_i)
    wt_slab = wt_slab.astype(jnp.bfloat16)

    # ---- vector slab (f32) --------------------------------------------------
    half = T_ // 2
    emb_scale = math.log(10000.0) / (half - 1) if half > 1 else 1.0
    freq = jnp.exp(jnp.arange(half, dtype=jnp.float32) * -emb_scale)
    freq_full = (jnp.zeros((D,), jnp.float32)
                 .at[0:half].set(freq)
                 .at[half:2 * half].set(freq))
    phase = jnp.zeros((D,), jnp.float32).at[half:2 * half].set(math.pi / 2.0)

    rows = [params["bt"], freq_full, phase] + [b for (_, b) in params["mlp"]]
    for g, b in params["bn"]:
        rows += [g, b]
    n_rows = _round_up(max(len(rows), 8), 8)
    v_slab = jnp.zeros((n_rows, D), jnp.float32)
    for r, v in enumerate(rows):
        v_slab = v_slab.at[r, :v.shape[0]].set(v)

    meta = dict(F=F_, T=T_, H=H_, L=L_, C=C, M=M, DPAD=D,
                bias_row0=3, gamma_row0=3 + L_)
    return dict(w_slab=w_slab, wt_slab=wt_slab, v_slab=v_slab, meta=meta)


# ----------------------------------------------------------------------------
# Pallas kernel: full forward for one (B, .) batch.  All loads/stores are
# lane-dense (B, 128) / (128, 128) tiles; padded lanes stay exact zeros.
# ----------------------------------------------------------------------------
def _mlp_kernel(meta, xc_ref, t_ref, w_ref, wt_ref, v_ref, out_ref):
    eps = 1e-5
    L_ = meta["L"]
    D = meta["DPAD"]

    # --- sinusoidal time embedding, in-kernel -------------------------------
    # cos(x) == sin(x + pi/2): one EUP sin over a lane-dense tile, no concat.
    freq = v_ref[1:2, :]                                   # (1, D) f32
    phase = v_ref[2:3, :]                                  # (1, D) f32
    t_sin = jnp.sin(t_ref[...] * freq + phase)             # (B, D); lanes>=T are 0

    # --- t_emb = relu(t_sin @ Wt + bt) ---------------------------------------
    t_emb = jnp.maximum(
        jnp.dot(t_sin.astype(jnp.bfloat16), w_ref[0:D, :],
                preferred_element_type=jnp.float32) + v_ref[0:1, :],
        0.0)                                               # (B, D); lanes>=T are 0

    # --- all layers' time contributions in one stacked matmul ---------------
    t_contrib = jnp.dot(t_emb.astype(jnp.bfloat16), wt_ref[...],
                        preferred_element_type=jnp.float32)    # (B, L*D)

    # --- MLP layers: z = h @ W_h_i + t_contrib_i + b_i -----------------------
    h = xc_ref[...]                                        # (B, D) f32
    for i in range(L_):
        r0 = (1 + i) * D
        b_row = meta["bias_row0"] + i
        z = (jnp.dot(h.astype(jnp.bfloat16), w_ref[r0:r0 + D, :],
                     preferred_element_type=jnp.float32)
             + t_contrib[:, i * D:(i + 1) * D]
             + v_ref[b_row:b_row + 1, :])
        if i < L_ - 1:
            g_row = meta["gamma_row0"] + 2 * i
            gamma = v_ref[g_row:g_row + 1, :]
            beta = v_ref[g_row + 1:g_row + 2, :]
            # training-mode BatchNorm1d: per-batch stats, biased variance
            mean = jnp.mean(z, axis=0, keepdims=True)
            zc = z - mean
            var = jnp.mean(zc * zc, axis=0, keepdims=True)
            h = jnp.maximum(zc * jax.lax.rsqrt(var + eps) * gamma + beta, 0.0)
        else:
            out_ref[...] = z                               # lane-dense (B, D) store


def _cost_estimate(packed, B, steps=1):
    meta = packed["meta"]
    D, L = meta["DPAD"], meta["L"]
    slab_bytes = sum(int(packed[k].size) * packed[k].dtype.itemsize
                     for k in ("w_slab", "wt_slab", "v_slab"))
    flops = 2 * B * D * D * (1 + 2 * L) * steps
    transcendentals = B * D * L * steps
    io_bytes = steps * B * (2 * D * 4 + 4)
    return pl.CostEstimate(flops=flops, transcendentals=transcendentals,
                           bytes_accessed=slab_bytes + io_bytes)


# ----------------------------------------------------------------------------
# Wrappers
# ----------------------------------------------------------------------------
def forward_pallas(packed, x, t, conds, cond_masks=None):
    """Single-call forward: x (B,F), t (B,), conds list of (B,Cj)."""
    meta = packed["meta"]
    D, F_ = meta["DPAD"], meta["F"]
    B = x.shape[0]

    conds, masks = _normalize_conds(x, conds, cond_masks)
    in_dim = meta["F"] + meta["C"] + meta["M"]
    pad = jnp.zeros((B, D - in_dim), x.dtype)
    xc = jnp.concatenate([x] + conds + masks + [pad], axis=-1)   # (B, D)
    t_col = t.astype(jnp.float32).reshape(B, 1)

    vmem = pltpu.MemorySpace.VMEM
    out = pl.pallas_call(
        functools.partial(_mlp_kernel, meta),
        out_shape=jax.ShapeDtypeStruct((B, D), jnp.float32),
        in_specs=[pl.BlockSpec(memory_space=vmem)] * 5,
        out_specs=pl.BlockSpec(memory_space=vmem),
        cost_estimate=_cost_estimate(packed, B, steps=1),
    )(xc, t_col, packed["w_slab"], packed["wt_slab"], packed["v_slab"])
    return out[:, :F_]


def forward_pallas_steps(packed, x, t, conds, cond_masks=None):
    """Many independent steps/chains in one launch: x (S,B,F), t (S,B),
    conds list of (S,B,Cj).  The three parameter slabs use constant
    index_maps so they are DMA'd once and stay VMEM-resident across the step
    grid; BN statistics are computed per step (same numerics as per-call)."""
    meta = packed["meta"]
    D, F_ = meta["DPAD"], meta["F"]
    S, B = x.shape[0], x.shape[1]

    conds, masks = _normalize_conds(x, conds, cond_masks)
    in_dim = meta["F"] + meta["C"] + meta["M"]
    pad = jnp.zeros(x.shape[:-1] + (D - in_dim,), x.dtype)
    xc = jnp.concatenate([x] + conds + masks + [pad], axis=-1)   # (S, B, D)
    t_col = t.astype(jnp.float32)[..., None]                     # (S, B, 1)

    w_slab, wt_slab, v_slab = packed["w_slab"], packed["wt_slab"], packed["v_slab"]
    out = pl.pallas_call(
        functools.partial(_mlp_kernel, meta),
        out_shape=jax.ShapeDtypeStruct((S, B, D), jnp.float32),
        grid=(S,),
        in_specs=[
            pl.BlockSpec((None, B, D), lambda s: (s, 0, 0)),
            pl.BlockSpec((None, B, 1), lambda s: (s, 0, 0)),
            pl.BlockSpec(w_slab.shape, lambda s: (0, 0)),    # resident
            pl.BlockSpec(wt_slab.shape, lambda s: (0, 0)),   # resident
            pl.BlockSpec(v_slab.shape, lambda s: (0, 0)),    # resident
        ],
        out_specs=pl.BlockSpec((None, B, D), lambda s: (s, 0, 0)),
        compiler_params=pltpu.CompilerParams(
            dimension_semantics=("parallel",)),              # both TCs on v7x
        cost_estimate=_cost_estimate(packed, B, steps=S),
    )(xc, t_col, w_slab, wt_slab, v_slab)
    return out[..., :F_]


# ----------------------------------------------------------------------------
# Pure-JAX references.
#   mixed=False : exact f32 math mirroring the torch forward.
#   mixed=True  : mirrors the kernel's numerics (bf16 matmul inputs with f32
#                 accumulation, sin(x+pi/2) for cos) for a tighter check.
# ----------------------------------------------------------------------------
def forward_reference(params, x, t, conds, cond_masks=None, mixed=False):
    d = params["dims"]
    T_, L_ = d["time_dim"], d["n_layers"]
    conds, masks = _normalize_conds(x, conds, cond_masks)
    eps = 1e-5

    def dot(a, w):
        if mixed:
            return jnp.dot(a.astype(jnp.bfloat16), w.astype(jnp.bfloat16),
                           preferred_element_type=jnp.float32)
        return a @ w

    if mixed:
        half = T_ // 2
        emb_scale = math.log(10000.0) / (half - 1) if half > 1 else 1.0
        freq = jnp.exp(jnp.arange(half, dtype=jnp.float32) * -emb_scale)
        ph = t.astype(jnp.float32)[:, None] * freq[None, :]
        t_emb = jnp.concatenate([jnp.sin(ph), jnp.sin(ph + math.pi / 2.0)], axis=1)
        if T_ % 2 == 1:
            t_emb = jnp.pad(t_emb, ((0, 0), (0, 1)))
    else:
        t_emb = sinusoidal_embedding(t, T_)
    t_emb = jnp.maximum(dot(t_emb, params["Wt"]) + params["bt"], 0.0)
    h = jnp.concatenate([x, t_emb] + conds + masks, axis=-1)
    for i, (W, b) in enumerate(params["mlp"]):
        h = dot(h, W) + b
        if i < L_ - 1:
            gamma, beta = params["bn"][i]
            mean = jnp.mean(h, axis=0, keepdims=True)
            var = jnp.mean((h - mean) ** 2, axis=0, keepdims=True)
            h = (h - mean) * jax.lax.rsqrt(var + eps) * gamma + beta
            h = jnp.maximum(h, 0.0)
            h = jnp.concatenate([h, t_emb], axis=-1)
    return h


if __name__ == "__main__":
    # Small shapes consistent with the module's forward.
    B = 8
    num_features = 16
    cond_dims = [8, 12]
    hidden_size = 32
    n_layers = 4
    time_embedding_dim = 16

    key = jax.random.PRNGKey(0)
    kp, kx, kt, kc0, kc1 = jax.random.split(key, 5)

    params = init_params(kp, num_features, cond_dims, hidden_size,
                         n_layers, time_embedding_dim)
    packed = prepare_params(params)   # one-time weight packing (hoisted)

    x = jax.random.normal(kx, (B, num_features), jnp.float32)
    t = jax.random.randint(kt, (B,), 0, 1000)
    conds = [
        jax.random.normal(kc0, (B, cond_dims[0]), jnp.float32),
        jax.random.normal(kc1, (B, cond_dims[1]), jnp.float32),
    ]

    # --- single-call path -----------------------------------------------------
    out = jax.block_until_ready(forward_pallas(packed, x, t, conds))
    assert out.shape == (B, num_features)

    ref_mixed = forward_reference(params, x, t, conds, mixed=True)
    err_mixed = float(jnp.max(jnp.abs(out - ref_mixed)))
    assert err_mixed < 5e-3, f"mismatch vs matched-precision ref: {err_mixed}"

    ref_f32 = forward_reference(params, x, t, conds, mixed=False)
    assert jnp.allclose(out, ref_f32, rtol=5e-2, atol=5e-2), (
        f"mismatch vs f32 ref: {float(jnp.max(jnp.abs(out - ref_f32)))}")

    # --- multi-step path (weights stay VMEM-resident across the step grid) ---
    S = 3
    kxs, kts, kc0s, kc1s = jax.random.split(jax.random.PRNGKey(1), 4)
    xs = jax.random.normal(kxs, (S, B, num_features), jnp.float32)
    ts = jax.random.randint(kts, (S, B), 0, 1000)
    conds_s = [
        jax.random.normal(kc0s, (S, B, cond_dims[0]), jnp.float32),
        jax.random.normal(kc1s, (S, B, cond_dims[1]), jnp.float32),
    ]
    outs = jax.block_until_ready(forward_pallas_steps(packed, xs, ts, conds_s))
    assert outs.shape == (S, B, num_features)
    for s in range(S):
        ref_s = forward_reference(params, xs[s], ts[s],
                                  [c[s] for c in conds_s], mixed=True)
        err_s = float(jnp.max(jnp.abs(outs[s] - ref_s)))
        assert err_s < 5e-3, f"step {s} mismatch vs matched-precision ref: {err_s}"

    print("KERNEL_OK")
</pallas_src>

<mosaic_0001>
module attributes {stable_mosaic.version = 11 : i64} {
  func.func @_mlp_kernel(%arg0: memref<8x128xf32, #tpu.memory_space<vmem>>, %arg1: memref<8x1xf32, #tpu.memory_space<vmem>>, %arg2: memref<640x128xbf16, #tpu.memory_space<vmem>>, %arg3: memref<128x512xbf16, #tpu.memory_space<vmem>>, %arg4: memref<16x128xf32, #tpu.memory_space<vmem>>, %arg5: memref<8x128xf32, #tpu.memory_space<vmem>>) attributes {dimension_semantics = [], scalar_prefetch = 0 : i64, scratch_operands = 0 : i64, tpu.core_type = #tpu.core_type<tc>} {
    %c1 = arith.constant 1 : index
    %c0 = arith.constant 0 : index
    %0 = vector.load %arg4[%c1, %c0] : memref<16x128xf32, #tpu.memory_space<vmem>>, vector<1x128xf32>
    %c2 = arith.constant 2 : index
    %c0_0 = arith.constant 0 : index
    %1 = vector.load %arg4[%c2, %c0_0] : memref<16x128xf32, #tpu.memory_space<vmem>>, vector<1x128xf32>
    %c0_1 = arith.constant 0 : index
    %c0_2 = arith.constant 0 : index
    %2 = vector.load %arg1[%c0_1, %c0_2] : memref<8x1xf32, #tpu.memory_space<vmem>>, vector<8x1xf32>
    %3 = vector.broadcast %2 : vector<8x1xf32> to vector<8x128xf32>
    %4 = vector.broadcast %0 : vector<1x128xf32> to vector<8x128xf32>
    %5 = arith.mulf %3, %4 : vector<8x128xf32>
    %6 = vector.broadcast %1 : vector<1x128xf32> to vector<8x128xf32>
    %7 = arith.addf %5, %6 : vector<8x128xf32>
    %8 = math.sin %7 : vector<8x128xf32>
    %9 = arith.truncf %8 : vector<8x128xf32> to vector<8x128xbf16>
    %c0_3 = arith.constant 0 : index
    %c0_4 = arith.constant 0 : index
    %10 = vector.load %arg2[%c0_3, %c0_4] : memref<640x128xbf16, #tpu.memory_space<vmem>>, vector<128x128xbf16>
    %cst = arith.constant dense<0.000000e+00> : vector<8x128xf32>
    %11 = tpu.matmul %9, %10, %cst {dimension_numbers = #tpu.dot_dimension_numbers<[1], [0], [0], [1], [0, 0, 1, 1], [], []>} : vector<8x128xbf16>, vector<128x128xbf16>, vector<8x128xf32> -> vector<8x128xf32>
    %c0_5 = arith.constant 0 : index
    %c0_6 = arith.constant 0 : index
    %12 = vector.load %arg4[%c0_5, %c0_6] : memref<16x128xf32, #tpu.memory_space<vmem>>, vector<1x128xf32>
    %13 = vector.broadcast %12 : vector<1x128xf32> to vector<8x128xf32>
    %14 = arith.addf %11, %13 : vector<8x128xf32>
    %cst_7 = arith.constant 0.000000e+00 : f32
    %15 = vector.broadcast %cst_7 : f32 to vector<8x128xf32>
    %16 = arith.maximumf %14, %15 : vector<8x128xf32>
    %17 = arith.truncf %16 : vector<8x128xf32> to vector<8x128xbf16>
    %c0_8 = arith.constant 0 : index
    %c0_9 = arith.constant 0 : index
    %18 = vector.load %arg3[%c0_8, %c0_9] : memref<128x512xbf16, #tpu.memory_space<vmem>>, vector<128x512xbf16>
    %cst_10 = arith.constant dense<0.000000e+00> : vector<8x512xf32>
    %19 = tpu.matmul %17, %18, %cst_10 {dimension_numbers = #tpu.dot_dimension_numbers<[1], [0], [0], [1], [0, 0, 1, 1], [], []>} : vector<8x128xbf16>, vector<128x512xbf16>, vector<8x512xf32> -> vector<8x512xf32>
    %c0_11 = arith.constant 0 : index
    %c0_12 = arith.constant 0 : index
    %20 = vector.load %arg0[%c0_11, %c0_12] : memref<8x128xf32, #tpu.memory_space<vmem>>, vector<8x128xf32>
    %21 = arith.truncf %20 : vector<8x128xf32> to vector<8x128xbf16>
    %c128 = arith.constant 128 : index
    %c0_13 = arith.constant 0 : index
    %22 = vector.load %arg2[%c128, %c0_13] : memref<640x128xbf16, #tpu.memory_space<vmem>>, vector<128x128xbf16>
    %cst_14 = arith.constant dense<0.000000e+00> : vector<8x128xf32>
    %23 = tpu.matmul %21, %22, %cst_14 {dimension_numbers = #tpu.dot_dimension_numbers<[1], [0], [0], [1], [0, 0, 1, 1], [], []>} : vector<8x128xbf16>, vector<128x128xbf16>, vector<8x128xf32> -> vector<8x128xf32>
    %24 = vector.extract_strided_slice %19 {offsets = [0, 0], sizes = [8, 128], strides = [1, 1]} : vector<8x512xf32> to vector<8x128xf32>
    %25 = arith.addf %23, %24 : vector<8x128xf32>
    %c3 = arith.constant 3 : index
    %c0_15 = arith.constant 0 : index
    %26 = vector.load %arg4[%c3, %c0_15] : memref<16x128xf32, #tpu.memory_space<vmem>>, vector<1x128xf32>
    %27 = vector.broadcast %26 : vector<1x128xf32> to vector<8x128xf32>
    %28 = arith.addf %25, %27 : vector<8x128xf32>
    %c7 = arith.constant 7 : index
    %c0_16 = arith.constant 0 : index
    %29 = vector.load %arg4[%c7, %c0_16] : memref<16x128xf32, #tpu.memory_space<vmem>>, vector<1x128xf32>
    %c8 = arith.constant 8 : index
    %c0_17 = arith.constant 0 : index
    %30 = vector.load %arg4[%c8, %c0_17] : memref<16x128xf32, #tpu.memory_space<vmem>>, vector<1x128xf32>
    %cst_18 = arith.constant dense<0.000000e+00> : vector<128xf32>
    %31 = vector.multi_reduction <add>, %28, %cst_18 [0] : vector<8x128xf32> to vector<128xf32>
    %32 = vector.shape_cast %31 : vector<128xf32> to vector<1x128xf32>
    %cst_19 = arith.constant 8.000000e+00 : f32
    %33 = vector.broadcast %cst_19 : f32 to vector<1x128xf32>
    %34 = arith.divf %32, %33 : vector<1x128xf32>
    %35 = vector.broadcast %34 : vector<1x128xf32> to vector<8x128xf32>
    %36 = arith.subf %28, %35 : vector<8x128xf32>
    %37 = arith.mulf %36, %36 : vector<8x128xf32>
    %cst_20 = arith.constant dense<0.000000e+00> : vector<128xf32>
    %38 = vector.multi_reduction <add>, %37, %cst_20 [0] : vector<8x128xf32> to vector<128xf32>
    %39 = vector.shape_cast %38 : vector<128xf32> to vector<1x128xf32>
    %cst_21 = arith.constant 8.000000e+00 : f32
    %40 = vector.broadcast %cst_21 : f32 to vector<1x128xf32>
    %41 = arith.divf %39, %40 : vector<1x128xf32>
    %cst_22 = arith.constant 9.99999974E-6 : f32
    %42 = vector.broadcast %cst_22 : f32 to vector<1x128xf32>
    %43 = arith.addf %41, %42 : vector<1x128xf32>
    %44 = math.rsqrt %43 : vector<1x128xf32>
    %45 = vector.broadcast %44 : vector<1x128xf32> to vector<8x128xf32>
    %46 = arith.mulf %36, %45 : vector<8x128xf32>
    %47 = vector.broadcast %29 : vector<1x128xf32> to vector<8x128xf32>
    %48 = arith.mulf %46, %47 : vector<8x128xf32>
    %49 = vector.broadcast %30 : vector<1x128xf32> to vector<8x128xf32>
    %50 = arith.addf %48, %49 : vector<8x128xf32>
    %cst_23 = arith.constant 0.000000e+00 : f32
    %51 = vector.broadcast %cst_23 : f32 to vector<8x128xf32>
    %52 = arith.maximumf %50, %51 : vector<8x128xf32>
    %53 = arith.truncf %52 : vector<8x128xf32> to vector<8x128xbf16>
    %c256 = arith.constant 256 : index
    %c0_24 = arith.constant 0 : index
    %54 = vector.load %arg2[%c256, %c0_24] : memref<640x128xbf16, #tpu.memory_space<vmem>>, vector<128x128xbf16>
    %cst_25 = arith.constant dense<0.000000e+00> : vector<8x128xf32>
    %55 = tpu.matmul %53, %54, %cst_25 {dimension_numbers = #tpu.dot_dimension_numbers<[1], [0], [0], [1], [0, 0, 1, 1], [], []>} : vector<8x128xbf16>, vector<128x128xbf16>, vector<8x128xf32> -> vector<8x128xf32>
    %56 = vector.extract_strided_slice %19 {offsets = [0, 128], sizes = [8, 128], strides = [1, 1]} : vector<8x512xf32> to vector<8x128xf32>
    %57 = arith.addf %55, %56 : vector<8x128xf32>
    %c4 = arith.constant 4 : index
    %c0_26 = arith.constant 0 : index
    %58 = vector.load %arg4[%c4, %c0_26] : memref<16x128xf32, #tpu.memory_space<vmem>>, vector<1x128xf32>
    %59 = vector.broadcast %58 : vector<1x128xf32> to vector<8x128xf32>
    %60 = arith.addf %57, %59 : vector<8x128xf32>
    %c9 = arith.constant 9 : index
    %c0_27 = arith.constant 0 : index
    %61 = vector.load %arg4[%c9, %c0_27] : memref<16x128xf32, #tpu.memory_space<vmem>>, vector<1x128xf32>
    %c10 = arith.constant 10 : index
    %c0_28 = arith.constant 0 : index
    %62 = vector.load %arg4[%c10, %c0_28] : memref<16x128xf32, #tpu.memory_space<vmem>>, vector<1x128xf32>
    %cst_29 = arith.constant dense<0.000000e+00> : vector<128xf32>
    %63 = vector.multi_reduction <add>, %60, %cst_29 [0] : vector<8x128xf32> to vector<128xf32>
    %64 = vector.shape_cast %63 : vector<128xf32> to vector<1x128xf32>
    %cst_30 = arith.constant 8.000000e+00 : f32
    %65 = vector.broadcast %cst_30 : f32 to vector<1x128xf32>
    %66 = arith.divf %64, %65 : vector<1x128xf32>
    %67 = vector.broadcast %66 : vector<1x128xf32> to vector<8x128xf32>
    %68 = arith.subf %60, %67 : vector<8x128xf32>
    %69 = arith.mulf %68, %68 : vector<8x128xf32>
    %cst_31 = arith.constant dense<0.000000e+00> : vector<128xf32>
    %70 = vector.multi_reduction <add>, %69, %cst_31 [0] : vector<8x128xf32> to vector<128xf32>
    %71 = vector.shape_cast %70 : vector<128xf32> to vector<1x128xf32>
    %cst_32 = arith.constant 8.000000e+00 : f32
    %72 = vector.broadcast %cst_32 : f32 to vector<1x128xf32>
    %73 = arith.divf %71, %72 : vector<1x128xf32>
    %cst_33 = arith.constant 9.99999974E-6 : f32
    %74 = vector.broadcast %cst_33 : f32 to vector<1x128xf32>
    %75 = arith.addf %73, %74 : vector<1x128xf32>
    %76 = math.rsqrt %75 : vector<1x128xf32>
    %77 = vector.broadcast %76 : vector<1x128xf32> to vector<8x128xf32>
    %78 = arith.mulf %68, %77 : vector<8x128xf32>
    %79 = vector.broadcast %61 : vector<1x128xf32> to vector<8x128xf32>
    %80 = arith.mulf %78, %79 : vector<8x128xf32>
    %81 = vector.broadcast %62 : vector<1x128xf32> to vector<8x128xf32>
    %82 = arith.addf %80, %81 : vector<8x128xf32>
    %cst_34 = arith.constant 0.000000e+00 : f32
    %83 = vector.broadcast %cst_34 : f32 to vector<8x128xf32>
    %84 = arith.maximumf %82, %83 : vector<8x128xf32>
    %85 = arith.truncf %84 : vector<8x128xf32> to vector<8x128xbf16>
    %c384 = arith.constant 384 : index
    %c0_35 = arith.constant 0 : index
    %86 = vector.load %arg2[%c384, %c0_35] : memref<640x128xbf16, #tpu.memory_space<vmem>>, vector<128x128xbf16>
    %cst_36 = arith.constant dense<0.000000e+00> : vector<8x128xf32>
    %87 = tpu.matmul %85, %86, %cst_36 {dimension_numbers = #tpu.dot_dimension_numbers<[1], [0], [0], [1], [0, 0, 1, 1], [], []>} : vector<8x128xbf16>, vector<128x128xbf16>, vector<8x128xf32> -> vector<8x128xf32>
    %88 = vector.extract_strided_slice %19 {offsets = [0, 256], sizes = [8, 128], strides = [1, 1]} : vector<8x512xf32> to vector<8x128xf32>
    %89 = arith.addf %87, %88 : vector<8x128xf32>
    %c5 = arith.constant 5 : index
    %c0_37 = arith.constant 0 : index
    %90 = vector.load %arg4[%c5, %c0_37] : memref<16x128xf32, #tpu.memory_space<vmem>>, vector<1x128xf32>
    %91 = vector.broadcast %90 : vector<1x128xf32> to vector<8x128xf32>
    %92 = arith.addf %89, %91 : vector<8x128xf32>
    %c11 = arith.constant 11 : index
    %c0_38 = arith.constant 0 : index
    %93 = vector.load %arg4[%c11, %c0_38] : memref<16x128xf32, #tpu.memory_space<vmem>>, vector<1x128xf32>
    %c12 = arith.constant 12 : index
    %c0_39 = arith.constant 0 : index
    %94 = vector.load %arg4[%c12, %c0_39] : memref<16x128xf32, #tpu.memory_space<vmem>>, vector<1x128xf32>
    %cst_40 = arith.constant dense<0.000000e+00> : vector<128xf32>
    %95 = vector.multi_reduction <add>, %92, %cst_40 [0] : vector<8x128xf32> to vector<128xf32>
    %96 = vector.shape_cast %95 : vector<128xf32> to vector<1x128xf32>
    %cst_41 = arith.constant 8.000000e+00 : f32
    %97 = vector.broadcast %cst_41 : f32 to vector<1x128xf32>
    %98 = arith.divf %96, %97 : vector<1x128xf32>
    %99 = vector.broadcast %98 : vector<1x128xf32> to vector<8x128xf32>
    %100 = arith.subf %92, %99 : vector<8x128xf32>
    %101 = arith.mulf %100, %100 : vector<8x128xf32>
    %cst_42 = arith.constant dense<0.000000e+00> : vector<128xf32>
    %102 = vector.multi_reduction <add>, %101, %cst_42 [0] : vector<8x128xf32> to vector<128xf32>
    %103 = vector.shape_cast %102 : vector<128xf32> to vector<1x128xf32>
    %cst_43 = arith.constant 8.000000e+00 : f32
    %104 = vector.broadcast %cst_43 : f32 to vector<1x128xf32>
    %105 = arith.divf %103, %104 : vector<1x128xf32>
    %cst_44 = arith.constant 9.99999974E-6 : f32
    %106 = vector.broadcast %cst_44 : f32 to vector<1x128xf32>
    %107 = arith.addf %105, %106 : vector<1x128xf32>
    %108 = math.rsqrt %107 : vector<1x128xf32>
    %109 = vector.broadcast %108 : vector<1x128xf32> to vector<8x128xf32>
    %110 = arith.mulf %100, %109 : vector<8x128xf32>
    %111 = vector.broadcast %93 : vector<1x128xf32> to vector<8x128xf32>
    %112 = arith.mulf %110, %111 : vector<8x128xf32>
    %113 = vector.broadcast %94 : vector<1x128xf32> to vector<8x128xf32>
    %114 = arith.addf %112, %113 : vector<8x128xf32>
    %cst_45 = arith.constant 0.000000e+00 : f32
    %115 = vector.broadcast %cst_45 : f32 to vector<8x128xf32>
    %116 = arith.maximumf %114, %115 : vector<8x128xf32>
    %117 = arith.truncf %116 : vector<8x128xf32> to vector<8x128xbf16>
    %c512 = arith.constant 512 : index
    %c0_46 = arith.constant 0 : index
    %118 = vector.load %arg2[%c512, %c0_46] : memref<640x128xbf16, #tpu.memory_space<vmem>>, vector<128x128xbf16>
    %cst_47 = arith.constant dense<0.000000e+00> : vector<8x128xf32>
    %119 = tpu.matmul %117, %118, %cst_47 {dimension_numbers = #tpu.dot_dimension_numbers<[1], [0], [0], [1], [0, 0, 1, 1], [], []>} : vector<8x128xbf16>, vector<128x128xbf16>, vector<8x128xf32> -> vector<8x128xf32>
    %120 = vector.extract_strided_slice %19 {offsets = [0, 384], sizes = [8, 128], strides = [1, 1]} : vector<8x512xf32> to vector<8x128xf32>
    %121 = arith.addf %119, %120 : vector<8x128xf32>
    %c6 = arith.constant 6 : index
    %c0_48 = arith.constant 0 : index
    %122 = vector.load %arg4[%c6, %c0_48] : memref<16x128xf32, #tpu.memory_space<vmem>>, vector<1x128xf32>
    %123 = vector.broadcast %122 : vector<1x128xf32> to vector<8x128xf32>
    %124 = arith.addf %121, %123 : vector<8x128xf32>
    %c0_49 = arith.constant 0 : index
    %c0_50 = arith.constant 0 : index
    %125 = vector.load %arg5[%c0_49, %c0_50] : memref<8x128xf32, #tpu.memory_space<vmem>>, vector<8x128xf32>
    tpu.vector_store %arg5[%c0_49, %c0_50], %124 {strides = array<i32>} : memref<8x128xf32, #tpu.memory_space<vmem>>, vector<8x128xf32>,
    return
  }
}

</mosaic_0001>

<llo_original>
// kernel: tpu_custom_call.1
$region0: #{tpu_custom_call.1}
  #allocation0 [shape = 'u32[]', space=smem, size = 0x4, offset = 0x4, fixed_abs, tag = 'smem constant byte address 0x4 - core index']
  #allocation1 [shape = 'u32[144,128]{1,0:T(1,128)}', space=vmem, size = 0x12000, scoped, tag = 'internal scratch']
  %s0 = inlined_call_operand.hbm [shape: f32[8,128], index: 0, kind: input, shape index: {}]
  %s1 = inlined_call_operand.vmem [shape: f32[8,1], index: 1, kind: input, shape index: {}]
  %s2 = inlined_call_operand.hbm [shape: bf16[640,128], index: 2, kind: input, shape index: {}]
  %s3 = inlined_call_operand.hbm [shape: bf16[128,512], index: 3, kind: input, shape index: {}]
  %s4 = inlined_call_operand.vmem [shape: f32[16,128], index: 4, kind: input, shape index: {}]
  %s5 = inlined_call_operand.hbm [shape: f32[8,128], index: 5, kind: output, shape index: {}]
  %s6 = sld [smem:[#allocation0]]
  $region42: #{tpu_custom_call.1} parent=0
    _
  %s8 = ssub.s32 1, %s6
  %s9 = scalar_select 0, %s8, %s6
  $region1: #{tpu_custom_call.1} parent=0
    #allocation2 [shape = 'u8[4096]{0}', space=vmem, size = 0x1000, scoped, tag = 'input window, operand 0, single buffered']
    #allocation3 [shape = 's32[1]{0}', space=sflag, size = 0x4, scoped, tag = 'scoped memory for tpu_custom_call.1']
    #allocation4 [shape = 's32[1]{0}', space=sflag, size = 0x4, scoped, tag = 'scoped memory for tpu_custom_call.1']
    #allocation5 [shape = 'u8[163840]{0}', space=vmem, size = 0x28000, scoped, tag = 'input window, operand 2, single buffered']
    #allocation6 [shape = 's32[1]{0}', space=sflag, size = 0x4, scoped, tag = 'scoped memory for tpu_custom_call.1']
    #allocation7 [shape = 'u8[131072]{0}', space=vmem, size = 0x20000, scoped, tag = 'input window, operand 3, single buffered']
    #allocation8 [shape = 'u8[4096]{0}', space=vmem, size = 0x1000, scoped, tag = 'output window, operand 0, single buffered']
    %10 = vsyncpa [#allocation3], 0
    %11 = vsyncpa [#allocation6], 0
    %12 = vsyncpa [#allocation4], 0
    // Predicated region
    $region2: #{tpu_custom_call.1} parent=1 // pred_check
      _
    $region3: #{tpu_custom_call.1} parent=1 // pred_check_branch
      %14 = sbr.rel (0) target = $region5
    $region4: #{tpu_custom_call.1} parent=1 // pred_region
      %s16 = ssub.s32 128, 128
      %17 = vsyncadd [#allocation3], %s16
      %s19 = sshll.u32 [#allocation2], 4
      %s20 = int_to_ptr.vmem [resolvable:$true] %s19
      %22 = dma.hbm_to_vmem [thread:$0]  %s0, 128, %s20, [#allocation3]
    $region5: #{tpu_custom_call.1} parent=1 // pred_fallthru
      _
    // Predicated region
    $region6: #{tpu_custom_call.1} parent=1 // pred_check
      _
    $region7: #{tpu_custom_call.1} parent=1 // pred_check_branch
      %24 = sbr.rel (0) target = $region9
    $region8: #{tpu_custom_call.1} parent=1 // pred_region
      _
    $region9: #{tpu_custom_call.1} parent=1 // pred_fallthru
      _
    // Predicated region
    $region10: #{tpu_custom_call.1} parent=1 // pred_check
      _
    $region11: #{tpu_custom_call.1} parent=1 // pred_check_branch
      %26 = sbr.rel (0) target = $region13
    $region12: #{tpu_custom_call.1} parent=1 // pred_region
      %s28 = ssub.s32 5120, 5120
      %29 = vsyncadd [#allocation6], %s28
      %s30 = sshll.u32 [#allocation5], 4
      %s31 = int_to_ptr.vmem [resolvable:$true] %s30
      %36 = dma.hbm_to_vmem [thread:$0]  %s2, 5120, %s31, [#allocation6], 64, 64, 4
    $region13: #{tpu_custom_call.1} parent=1 // pred_fallthru
      _
    // Predicated region
    $region14: #{tpu_custom_call.1} parent=1 // pred_check
      _
    $region15: #{tpu_custom_call.1} parent=1 // pred_check_branch
      %38 = sbr.rel (0) target = $region17
    $region16: #{tpu_custom_call.1} parent=1 // pred_region
      %s40 = ssub.s32 4096, 4096
      %41 = vsyncadd [#allocation6], %s40
      %s42 = sshll.u32 [#allocation7], 4
      %s43 = int_to_ptr.vmem [resolvable:$true] %s42
      %48 = dma.hbm_to_vmem [thread:$0]  %s3, 4096, %s43, [#allocation6], 256, 256, 16
    $region17: #{tpu_custom_call.1} parent=1 // pred_fallthru
      _
    // Predicated region
    $region18: #{tpu_custom_call.1} parent=1 // pred_check
      _
    $region19: #{tpu_custom_call.1} parent=1 // pred_check_branch
      %50 = sbr.rel (0) target = $region21
    $region20: #{tpu_custom_call.1} parent=1 // pred_region
      _
    $region21: #{tpu_custom_call.1} parent=1 // pred_fallthru
      _
    // Predicated region
    $region22: #{tpu_custom_call.1} parent=1 // pred_check
      _
    $region23: #{tpu_custom_call.1} parent=1 // pred_check_branch
      %52 = sbr.rel (0) target = $region25
    $region24: #{tpu_custom_call.1} parent=1 // pred_region
      %53 = dma.done [#allocation3], 128
    $region25: #{tpu_custom_call.1} parent=1 // pred_fallthru
      _
    // Predicated region
    $region26: #{tpu_custom_call.1} parent=1 // pred_check
      _
    $region27: #{tpu_custom_call.1} parent=1 // pred_check_branch
      %55 = sbr.rel (0) target = $region29
    $region28: #{tpu_custom_call.1} parent=1 // pred_region
      %56 = dma.done [#allocation6], 5120
    $region29: #{tpu_custom_call.1} parent=1 // pred_fallthru
      _
    // Predicated region
    $region30: #{tpu_custom_call.1} parent=1 // pred_check
      _
    $region31: #{tpu_custom_call.1} parent=1 // pred_check_branch
      %58 = sbr.rel (0) target = $region33
    $region32: #{tpu_custom_call.1} parent=1 // pred_region
      %59 = dma.done [#allocation6], 4096
    $region33: #{tpu_custom_call.1} parent=1 // pred_fallthru
      _
    %v61 = vld [vmem:[%s4 + $0x1] sm:$0x1]
    %v62 = vld [vmem:[%s4 + $0x2] sm:$0x1]
    %v63 = vld [vmem:[%s1] sm:$0xff]
    %65 = vset.pattern.permute.xlu0 0
    %66 = vperm.xlu0 %65, %v63
    %v67 = vpop.permute.xlu0 %66
    %v69 = vlaneseq
    %v70 = vshrl.u32 %v69, 7
    %v71 = vsub.s32 0, %v70
    %v72 = vrot.slane %v61, %v71
    %v73 = vmul.f32 %v67, %v72
    %v74 = vlaneseq
    %v75 = vshrl.u32 %v74, 7
    %v76 = vsub.s32 0, %v75
    %v77 = vrot.slane %v62, %v76
    %v78 = vadd.f32 %v73, %v77
    %v79 = vand.u32 2147483647, %v78
    %vm80 = vcmp.le.f32.partialorder %v79, 0.7853982
    %vm81 = vcmp.lt.s32.totalorder %v78, 0
    %v82 = vand.u32 %v78, 2139095040
    %v83 = vshrl.u32 %v82, 23
    %v84 = vsub.s32 %v83, 127
    %v85 = vand.u32 2147483647, %v78
    %v86 = vand.u32 %v85, 8388607
    %v87 = vor.u32 %v86, 8388608
    %v88 = vsub.s32 0, %v87
    %v89 = vadd.s32 %v84, 1
    %vm90 = vcmp.gt.s32.totalorder %v89, 0
    %v91 = vsel %vm90, %v89, 0
    %v92 = vshrl.u32 %v91, 5
    %v93 = vand.u32 %v91, 31
    %v94 = vsub.s32 32, %v93
    %v95 = vshrl.u32 683565275, %v94
    %v96 = vshll.u32 683565275, %v93
    %v97 = vshrl.u32 2475754826, %v94
    %v98 = vor.u32 %v96, %v97
    %v99 = vshll.u32 2475754826, %v93
    %v100 = vshrl.u32 2131351028, %v94
    %v101 = vor.u32 %v99, %v100
    %v102 = vshll.u32 2131351028, %v93
    %v103 = vshrl.u32 2102212464, %v94
    %v104 = vor.u32 %v102, %v103
    %v105 = vshll.u32 2102212464, %v93
    %v106 = vshrl.u32 920167782, %v94
    %v107 = vor.u32 %v105, %v106
    %v108 = vshll.u32 920167782, %v93
    %v109 = vshrl.u32 1326507024, %v94
    %v110 = vor.u32 %v108, %v109
    %vm111 = vcmp.lt.s32.totalorder %v92, 1
    %vm112 = vcmp.lt.s32.totalorder %v92, 2
    %vm113 = vcmp.lt.s32.totalorder %v92, 3
    %vm114 = vcmp.lt.s32.totalorder %v92, 4
    %v115 = vsel %vm111, %v95, %v98
    %v116 = vsel %vm114, %v104, 2102212464
    %v117 = vsel %vm113, %v101, %v116
    %v118 = vsel %vm112, %v115, %v117
    %v119 = vsel %vm111, %v98, %v101
    %v120 = vsel %vm114, %v107, 920167782
    %v121 = vsel %vm113, %v104, %v120
    %v122 = vsel %vm112, %v119, %v121
    %v123 = vsel %vm111, %v101, %v104
    %v124 = vsel %vm114, %v110, 1326507024
    %v125 = vsel %vm113, %v107, %v124
    %v126 = vsel %vm112, %v123, %v125
    %v127 = vshll.u32 %v87, 8
    %v128 = vmul.u32.u64.compose %v127, %v126
    %v129 = vextract.low.u32 %v128
    %v130 = vextract.high.u32 %v128
    %v131 = vmul.u32.u64.compose %v127, %v122
    %v132 = vextract.low.u32 %v131
    %v133 = vextract.high.u32 %v131
    %v134 = vmul.u32 %v127, %v118
    %v135 = vadd.s32 %v130, %v132
    %vm136 = vc.u32 %v130, %v132
    %v137 = vadd.s32 %v133, 1
    %v138 = vsel %vm136, %v137, %v133
    %v139 = vadd.s32 %v134, %v138
    %v140 = vadd.s32 %v139, 536870912
    %v141 = vshrl.u32 %v140, 30
    %v142 = vshll.u32 %v141, 30
    %v143 = vsub.s32 %v139, %v142
    %vm144 = vcmp.lt.s32.totalorder %v143, 0
    %v145 = vsub.s32 0, %v143
    %v146 = vsel %vm144, %v145, %v143
    %v147 = vclz %v146
    %v148 = vsub.s32 %v147, 2
    %vm149 = vcmp.gt.s32.totalorder 0, %v148
    %v150 = vsel %vm149, 0, %v148
    %v151 = vsub.s32 32, %v150
    %v152 = vshll.u32 %v143, %v150
    %v153 = vshrl.u32 %v135, %v151
    %v154 = vor.u32 %v152, %v153
    %v155 = vsub.s32 4294967266, %v150
    %v156 = vadd.s32 %v155, 127
    %v157 = vshll.u32 %v156, 23
    %v158 = vor.u32 4788187, %v157
    %v159 = vand.u32 2147483647, %v158
    %v161 = vcvt.s32.f32 %v154
    %v162 = vmul.f32 %v161, %v159
    %v163 = vxor.u32 %v162, 2147483648
    %v164 = vsel %vm81, %v163, %v162
    %v165 = vsub.s32 4, %v141
    %v166 = vsel %vm81, %v165, %v141
    %v167 = vsel %vm80, %v78, %v164
    %v168 = vsel %vm80, 0, %v166
    %v169 = vcosq.f32.pop %v167
    %v170 = vsinq.f32.pop %v167
    %vm171 = vweird.f32 %v78
    %v172 = vadd.s32 %v168, 3
    %v173 = vand.u32 %v172, 3
    %vm174 = vcmp.lt.s32.totalorder %v173, 2
    %vm175 = vcmp.eq.s32.totalorder %v173, 0
    %v176 = vxor.u32 %v170, 2147483648
    %v177 = vsel %vm175, %v169, %v176
    %vm178 = vcmp.eq.s32.totalorder %v173, 2
    %v179 = vxor.u32 %v169, 2147483648
    %v180 = vsel %vm178, %v179, %v170
    %v181 = vsel %vm174, %v177, %v180
    %v182 = vsel %vm171, nan, %v181
    %v183 = vpack.c.bf16 %v182, %v182
    %v184 = vld [vmem:[#allocation5] sm:$0xf]
    %v185 = vld [vmem:[#allocation5 + $0x4] sm:$0xf]
    %v186 = vld [vmem:[#allocation5 + $0x8] sm:$0xf]
    %v187 = vld [vmem:[#allocation5 + $0xc] sm:$0xf]
    %v188 = vld [vmem:[#allocation5 + $0x10] sm:$0xf]
    %v189 = vld [vmem:[#allocation5 + $0x14] sm:$0xf]
    %v190 = vld [vmem:[#allocation5 + $0x18] sm:$0xf]
    %v191 = vld [vmem:[#allocation5 + $0x1c] sm:$0xf]
    %v192 = vld [vmem:[#allocation5 + $0x20] sm:$0xf]
    %v193 = vld [vmem:[#allocation5 + $0x24] sm:$0xf]
    %v194 = vld [vmem:[#allocation5 + $0x28] sm:$0xf]
    %v195 = vld [vmem:[#allocation5 + $0x2c] sm:$0xf]
    %v196 = vld [vmem:[#allocation5 + $0x30] sm:$0xf]
    %v197 = vld [vmem:[#allocation5 + $0x34] sm:$0xf]
    %v198 = vld [vmem:[#allocation5 + $0x38] sm:$0xf]
    %v199 = vld [vmem:[#allocation5 + $0x3c] sm:$0xf]
    %v200 = vld [vmem:[%s4] sm:$0x1]
    %v201 = vlaneseq
    %v202 = vshrl.u32 %v201, 7
    %v203 = vsub.s32 0, %v202
    %v204 = vrot.slane %v200, %v203
    %v221 = vunpack.c.l.b16 %v184
    %v222 = vunpack.c.l.b16 %v185
    %v223 = vunpack.c.l.b16 %v186
    %v224 = vunpack.c.l.b16 %v187
    %v225 = vunpack.c.l.b16 %v188
    %v226 = vunpack.c.l.b16 %v189
    %v227 = vunpack.c.l.b16 %v190
    %v228 = vunpack.c.l.b16 %v191
    %v229 = vunpack.c.l.b16 %v192
    %v230 = vunpack.c.l.b16 %v193
    %v231 = vunpack.c.l.b16 %v194
    %v232 = vunpack.c.l.b16 %v195
    %v233 = vunpack.c.l.b16 %v196
    %v234 = vunpack.c.l.b16 %v197
    %v235 = vunpack.c.l.b16 %v198
    %v236 = vunpack.c.l.b16 %v199
    %v237 = vpack.c.b16 %v222, %v221
    %v238 = vpack.c.b16 %v224, %v223
    %v239 = vpack.c.b16 %v226, %v225
    %v240 = vpack.c.b16 %v228, %v227
    %v241 = vpack.c.b16 %v230, %v229
    %v242 = vpack.c.b16 %v232, %v231
    %v243 = vpack.c.b16 %v234, %v233
    %v244 = vpack.c.b16 %v236, %v235
    %253 = vmatprep.subr.bf16.mxu0 0
    %254 = vmatpush1.bf16.msra.mxu0 %v244
    %255 = vmatprep.subr.bf16.mxu0 0
    %256 = vmatpush1.bf16.msra.mxu0 %v243
    %257 = vmatprep.subr.bf16.mxu0 0
    %258 = vmatpush1.bf16.msra.mxu0 %v242
    %259 = vmatprep.subr.bf16.mxu0 0
    %260 = vmatpush1.bf16.msra.mxu0 %v241
    %261 = vmatprep.subr.bf16.mxu0 0
    %262 = vmatpush1.bf16.msra.mxu0 %v240
    %263 = vmatprep.subr.bf16.mxu0 0
    %264 = vmatpush1.bf16.msra.mxu0 %v239
    %265 = vmatprep.subr.bf16.mxu0 0
    %266 = vmatpush1.bf16.msra.mxu0 %v238
    %267 = vmatprep.subr.bf16.mxu0 0
    %268 = vmatpush1.bf16.msra.mxu0 %v237
    %269 = vmatprep.subr.bf16.mxu0 0
    %270 = vmatpush2.bf16.msra.mxu0 0
    %271 = vmatprep.subr.bf16.mxu0 0
    %272 = vmatpush2.bf16.msra.mxu0 0
    %273 = vmatprep.subr.bf16.mxu0 0
    %274 = vmatpush2.bf16.msra.mxu0 0
    %275 = vmatprep.subr.bf16.mxu0 0
    %276 = vmatpush2.bf16.msra.mxu0 0
    %277 = vmatprep.subr.bf16.mxu0 0
    %278 = vmatpush2.bf16.msra.mxu0 0
    %279 = vmatprep.subr.bf16.mxu0 0
    %280 = vmatpush2.bf16.msra.mxu0 0
    %281 = vmatprep.subr.bf16.mxu0 0
    %282 = vmatpush2.bf16.msra.mxu0 0
    %283 = vmatprep.subr.bf16.mxu0 0
    %284 = vmatpush2.bf16.msra.mxu0 0
    %285 = vmatprep.mubr.bf16.mxu0 0
    %286 = vmatmul.mubr.bf16.gmra.mxu0 %v183
    %v287 = vpop.f32.mrf.mxu0
    %v288 = vadd.f32 %v204, %v287
    %v289 = vpop.f32.mrf.mxu0
    %v290 = vpop.f32.mrf.mxu0
    %v291 = vpop.f32.mrf.mxu0
    %292 = vdwg.mxu0
    %v293 = vmax.f32 %v288, 0.0
    %v294 = vpack.c.bf16 %v293, %v293
    %v295 = vld [vmem:[#allocation7] sm:$0xff]
    %v296 = vld [vmem:[#allocation7 + $0x8] sm:$0xff]
    %v297 = vld [vmem:[#allocation7 + $0x10] sm:$0xff]
    %v298 = vld [vmem:[#allocation7 + $0x18] sm:$0xff]
    %v299 = vld [vmem:[#allocation7 + $0x20] sm:$0xff]
    %v300 = vld [vmem:[#allocation7 + $0x28] sm:$0xff]
    %v301 = vld [vmem:[#allocation7 + $0x30] sm:$0xff]
    %v302 = vld [vmem:[#allocation7 + $0x38] sm:$0xff]
    %v303 = vld [vmem:[#allocation7 + $0x40] sm:$0xff]
    %v304 = vld [vmem:[#allocation7 + $0x48] sm:$0xff]
    %v305 = vld [vmem:[#allocation7 + $0x50] sm:$0xff]
    %v306 = vld [vmem:[#allocation7 + $0x58] sm:$0xff]
    %v307 = vld [vmem:[#allocation7 + $0x60] sm:$0xff]
    %v308 = vld [vmem:[#allocation7 + $0x68] sm:$0xff]
    %v309 = vld [vmem:[#allocation7 + $0x70] sm:$0xff]
    %v310 = vld [vmem:[#allocation7 + $0x78] sm:$0xff]
    %v311 = vld [vmem:[#allocation7 + $0x80] sm:$0xff]
    %v312 = vld [vmem:[#allocation7 + $0x88] sm:$0xff]
    %v313 = vld [vmem:[#allocation7 + $0x90] sm:$0xff]
    %v314 = vld [vmem:[#allocation7 + $0x98] sm:$0xff]
    %v315 = vld [vmem:[#allocation7 + $0xa0] sm:$0xff]
    %v316 = vld [vmem:[#allocation7 + $0xa8] sm:$0xff]
    %v317 = vld [vmem:[#allocation7 + $0xb0] sm:$0xff]
    %v318 = vld [vmem:[#allocation7 + $0xb8] sm:$0xff]
    %v319 = vld [vmem:[#allocation7 + $0xc0] sm:$0xff]
    %v320 = vld [vmem:[#allocation7 + $0xc8] sm:$0xff]
    %v321 = vld [vmem:[#allocation7 + $0xd0] sm:$0xff]
    %v322 = vld [vmem:[#allocation7 + $0xd8] sm:$0xff]
    %v323 = vld [vmem:[#allocation7 + $0xe0] sm:$0xff]
    %v324 = vld [vmem:[#allocation7 + $0xe8] sm:$0xff]
    %v325 = vld [vmem:[#allocation7 + $0xf0] sm:$0xff]
    %v326 = vld [vmem:[#allocation7 + $0xf8] sm:$0xff]
    %v359 = vunpack.c.l.b16 %v295
    %v360 = vunpack.c.h.b16 %v295
    %v361 = vunpack.c.l.b16 %v296
    %v362 = vunpack.c.h.b16 %v296
    %v363 = vunpack.c.l.b16 %v297
    %v364 = vunpack.c.h.b16 %v297
    %v365 = vunpack.c.l.b16 %v298
    %v366 = vunpack.c.h.b16 %v298
    %v367 = vunpack.c.l.b16 %v299
    %v368 = vunpack.c.h.b16 %v299
    %v369 = vunpack.c.l.b16 %v300
    %v370 = vunpack.c.h.b16 %v300
    %v371 = vunpack.c.l.b16 %v301
    %v372 = vunpack.c.h.b16 %v301
    %v373 = vunpack.c.l.b16 %v302
    %v374 = vunpack.c.h.b16 %v302
    %v375 = vunpack.c.l.b16 %v303
    %v376 = vunpack.c.h.b16 %v303
    %v377 = vunpack.c.l.b16 %v304
    %v378 = vunpack.c.h.b16 %v304
    %v379 = vunpack.c.l.b16 %v305
    %v380 = vunpack.c.h.b16 %v305
    %v381 = vunpack.c.l.b16 %v306
    %v382 = vunpack.c.h.b16 %v306
    %v383 = vunpack.c.l.b16 %v307
    %v384 = vunpack.c.h.b16 %v307
    %v385 = vunpack.c.l.b16 %v308
    %v386 = vunpack.c.h.b16 %v308
    %v387 = vunpack.c.l.b16 %v309
    %v388 = vunpack.c.h.b16 %v309
    %v389 = vunpack.c.l.b16 %v310
    %v390 = vunpack.c.h.b16 %v310
    %v391 = vunpack.c.l.b16 %v311
    %v392 = vunpack.c.h.b16 %v311
    %v393 = vunpack.c.l.b16 %v312
    %v394 = vunpack.c.h.b16 %v312
    %v395 = vunpack.c.l.b16 %v313
    %v396 = vunpack.c.h.b16 %v313
    %v397 = vunpack.c.l.b16 %v314
    %v398 = vunpack.c.h.b16 %v314
    %v399 = vunpack.c.l.b16 %v315
    %v400 = vunpack.c.h.b16 %v315
    %v401 = vunpack.c.l.b16 %v316
    %v402 = vunpack.c.h.b16 %v316
    %v403 = vunpack.c.l.b16 %v317
    %v404 = vunpack.c.h.b16 %v317
    %v405 = vunpack.c.l.b16 %v318
    %v406 = vunpack.c.h.b16 %v318
    %v407 = vunpack.c.l.b16 %v319
    %v408 = vunpack.c.h.b16 %v319
    %v409 = vunpack.c.l.b16 %v320
    %v410 = vunpack.c.h.b16 %v320
    %v411 = vunpack.c.l.b16 %v321
    %v412 = vunpack.c.h.b16 %v321
    %v413 = vunpack.c.l.b16 %v322
    %v414 = vunpack.c.h.b16 %v322
    %v415 = vunpack.c.l.b16 %v323
    %v416 = vunpack.c.h.b16 %v323
    %v417 = vunpack.c.l.b16 %v324
    %v418 = vunpack.c.h.b16 %v324
    %v419 = vunpack.c.l.b16 %v325
    %v420 = vunpack.c.h.b16 %v325
    %v421 = vunpack.c.l.b16 %v326
    %v422 = vunpack.c.h.b16 %v326
    %v423 = vpack.c.b16 %v363, %v359
    %v424 = vpack.c.b16 %v364, %v360
    %v425 = vpack.c.b16 %v365, %v361
    %v426 = vpack.c.b16 %v366, %v362
    %v427 = vpack.c.b16 %v371, %v367
    %v428 = vpack.c.b16 %v372, %v368
    %v429 = vpack.c.b16 %v373, %v369
    %v430 = vpack.c.b16 %v374, %v370
    %v431 = vpack.c.b16 %v379, %v375
    %v432 = vpack.c.b16 %v380, %v376
    %v433 = vpack.c.b16 %v381, %v377
    %v434 = vpack.c.b16 %v382, %v378
    %v435 = vpack.c.b16 %v387, %v383
    %v436 = vpack.c.b16 %v388, %v384
    %v437 = vpack.c.b16 %v389, %v385
    %v438 = vpack.c.b16 %v390, %v386
    %v439 = vpack.c.b16 %v395, %v391
    %v440 = vpack.c.b16 %v396, %v392
    %v441 = vpack.c.b16 %v397, %v393
    %v442 = vpack.c.b16 %v398, %v394
    %v443 = vpack.c.b16 %v403, %v399
    %v444 = vpack.c.b16 %v404, %v400
    %v445 = vpack.c.b16 %v405, %v401
    %v446 = vpack.c.b16 %v406, %v402
    %v447 = vpack.c.b16 %v411, %v407
    %v448 = vpack.c.b16 %v412, %v408
    %v449 = vpack.c.b16 %v413, %v409
    %v450 = vpack.c.b16 %v414, %v410
    %v451 = vpack.c.b16 %v419, %v415
    %v452 = vpack.c.b16 %v420, %v416
    %v453 = vpack.c.b16 %v421, %v417
    %v454 = vpack.c.b16 %v422, %v418
    %487 = vmatprep.subr.bf16.mxu0 %v452
    %488 = vmatpush1.bf16.msra.mxu0 %v451
    %489 = vmatprep.subr.bf16.mxu0 %v448
    %490 = vmatpush1.bf16.msra.mxu0 %v447
    %491 = vmatprep.subr.bf16.mxu0 %v444
    %492 = vmatpush1.bf16.msra.mxu0 %v443
    %493 = vmatprep.subr.bf16.mxu0 %v440
    %494 = vmatpush1.bf16.msra.mxu0 %v439
    %495 = vmatprep.subr.bf16.mxu0 %v436
    %496 = vmatpush1.bf16.msra.mxu0 %v435
    %497 = vmatprep.subr.bf16.mxu0 %v432
    %498 = vmatpush1.bf16.msra.mxu0 %v431
    %499 = vmatprep.subr.bf16.mxu0 %v428
    %500 = vmatpush1.bf16.msra.mxu0 %v427
    %501 = vmatprep.subr.bf16.mxu0 %v424
    %502 = vmatpush1.bf16.msra.mxu0 %v423
    %503 = vmatprep.subr.bf16.mxu0 0
    %504 = vmatpush2.bf16.msra.mxu0 0
    %505 = vmatprep.subr.bf16.mxu0 0
    %506 = vmatpush2.bf16.msra.mxu0 0
    %507 = vmatprep.subr.bf16.mxu0 0
    %508 = vmatpush2.bf16.msra.mxu0 0
    %509 = vmatprep.subr.bf16.mxu0 0
    %510 = vmatpush2.bf16.msra.mxu0 0
    %511 = vmatprep.subr.bf16.mxu0 0
    %512 = vmatpush2.bf16.msra.mxu0 0
    %513 = vmatprep.subr.bf16.mxu0 0
    %514 = vmatpush2.bf16.msra.mxu0 0
    %515 = vmatprep.subr.bf16.mxu0 0
    %516 = vmatpush2.bf16.msra.mxu0 0
    %517 = vmatprep.subr.bf16.mxu0 0
    %518 = vmatpush2.bf16.msra.mxu0 0
    %519 = vmatprep.mubr.bf16.mxu0 0
    %520 = vmatmul.mubr.bf16.gmra.mxu0 %v294
    %v521 = vpop.f32.mrf.mxu0
    %v522 = vadd.f32 0.0, %v521
    %v523 = vpop.f32.mrf.mxu0
    %v524 = vadd.f32 0.0, %v523
    %v525 = vpop.f32.mrf.mxu0
    %v526 = vpop.f32.mrf.mxu0
    %527 = vdwg.mxu0
    %528 = vmatprep.subr.bf16.mxu0 %v454
    %529 = vmatpush1.bf16.msra.mxu0 %v453
    %530 = vmatprep.subr.bf16.mxu0 %v450
    %531 = vmatpush1.bf16.msra.mxu0 %v449
    %532 = vmatprep.subr.bf16.mxu0 %v446
    %533 = vmatpush1.bf16.msra.mxu0 %v445
    %534 = vmatprep.subr.bf16.mxu0 %v442
    %535 = vmatpush1.bf16.msra.mxu0 %v441
    %536 = vmatprep.subr.bf16.mxu0 %v438
    %537 = vmatpush1.bf16.msra.mxu0 %v437
    %538 = vmatprep.subr.bf16.mxu0 %v434
    %539 = vmatpush1.bf16.msra.mxu0 %v433
    %540 = vmatprep.subr.bf16.mxu0 %v430
    %541 = vmatpush1.bf16.msra.mxu0 %v429
    %542 = vmatprep.subr.bf16.mxu0 %v426
    %543 = vmatpush1.bf16.msra.mxu0 %v425
    %544 = vmatprep.subr.bf16.mxu0 0
    %545 = vmatpush2.bf16.msra.mxu0 0
    %546 = vmatprep.subr.bf16.mxu0 0
    %547 = vmatpush2.bf16.msra.mxu0 0
    %548 = vmatprep.subr.bf16.mxu0 0
    %549 = vmatpush2.bf16.msra.mxu0 0
    %550 = vmatprep.subr.bf16.mxu0 0
    %551 = vmatpush2.bf16.msra.mxu0 0
    %552 = vmatprep.subr.bf16.mxu0 0
    %553 = vmatpush2.bf16.msra.mxu0 0
    %554 = vmatprep.subr.bf16.mxu0 0
    %555 = vmatpush2.bf16.msra.mxu0 0
    %556 = vmatprep.subr.bf16.mxu0 0
    %557 = vmatpush2.bf16.msra.mxu0 0
    %558 = vmatprep.subr.bf16.mxu0 0
    %559 = vmatpush2.bf16.msra.mxu0 0
    %560 = vmatprep.mubr.bf16.mxu0 0
    %561 = vmatmul.mubr.bf16.gmra.mxu0 %v294
    %v562 = vpop.f32.mrf.mxu0
    %v563 = vadd.f32 0.0, %v562
    %v564 = vpop.f32.mrf.mxu0
    %v565 = vadd.f32 0.0, %v564
    %v566 = vpop.f32.mrf.mxu0
    %v567 = vpop.f32.mrf.mxu0
    %568 = vdwg.mxu0
    %v569 = vld [vmem:[#allocation2] sm:$0xff]
    %v570 = vpack.c.bf16 %v569, %v569
    %v571 = vld [vmem:[#allocation5 + $0x40] sm:$0xf]
    %v572 = vld [vmem:[#allocation5 + $0x44] sm:$0xf]
    %v573 = vld [vmem:[#allocation5 + $0x48] sm:$0xf]
    %v574 = vld [vmem:[#allocation5 + $0x4c] sm:$0xf]
    %v575 = vld [vmem:[#allocation5 + $0x50] sm:$0xf]
    %v576 = vld [vmem:[#allocation5 + $0x54] sm:$0xf]
    %v577 = vld [vmem:[#allocation5 + $0x58] sm:$0xf]
    %v578 = vld [vmem:[#allocation5 + $0x5c] sm:$0xf]
    %v579 = vld [vmem:[#allocation5 + $0x60] sm:$0xf]
    %v580 = vld [vmem:[#allocation5 + $0x64] sm:$0xf]
    %v581 = vld [vmem:[#allocation5 + $0x68] sm:$0xf]
    %v582 = vld [vmem:[#allocation5 + $0x6c] sm:$0xf]
    %v583 = vld [vmem:[#allocation5 + $0x70] sm:$0xf]
    %v584 = vld [vmem:[#allocation5 + $0x74] sm:$0xf]
    %v585 = vld [vmem:[#allocation5 + $0x78] sm:$0xf]
    %v586 = vld [vmem:[#allocation5 + $0x7c] sm:$0xf]
    %v603 = vunpack.c.l.b16 %v571
    %v604 = vunpack.c.l.b16 %v572
    %v605 = vunpack.c.l.b16 %v573
    %v606 = vunpack.c.l.b16 %v574
    %v607 = vunpack.c.l.b16 %v575
    %v608 = vunpack.c.l.b16 %v576
    %v609 = vunpack.c.l.b16 %v577
    %v610 = vunpack.c.l.b16 %v578
    %v611 = vunpack.c.l.b16 %v579
    %v612 = vunpack.c.l.b16 %v580
    %v613 = vunpack.c.l.b16 %v581
    %v614 = vunpack.c.l.b16 %v582
    %v615 = vunpack.c.l.b16 %v583
    %v616 = vunpack.c.l.b16 %v584
    %v617 = vunpack.c.l.b16 %v585
    %v618 = vunpack.c.l.b16 %v586
    %v619 = vpack.c.b16 %v604, %v603
    %v620 = vpack.c.b16 %v606, %v605
    %v621 = vpack.c.b16 %v608, %v607
    %v622 = vpack.c.b16 %v610, %v609
    %v623 = vpack.c.b16 %v612, %v611
    %v624 = vpack.c.b16 %v614, %v613
    %v625 = vpack.c.b16 %v616, %v615
    %v626 = vpack.c.b16 %v618, %v617
    %635 = vmatprep.subr.bf16.mxu0 0
    %636 = vmatpush1.bf16.msra.mxu0 %v626
    %637 = vmatprep.subr.bf16.mxu0 0
    %638 = vmatpush1.bf16.msra.mxu0 %v625
    %639 = vmatprep.subr.bf16.mxu0 0
    %640 = vmatpush1.bf16.msra.mxu0 %v624
    %641 = vmatprep.subr.bf16.mxu0 0
    %642 = vmatpush1.bf16.msra.mxu0 %v623
    %643 = vmatprep.subr.bf16.mxu0 0
    %644 = vmatpush1.bf16.msra.mxu0 %v622
    %645 = vmatprep.subr.bf16.mxu0 0
    %646 = vmatpush1.bf16.msra.mxu0 %v621
    %647 = vmatprep.subr.bf16.mxu0 0
    %648 = vmatpush1.bf16.msra.mxu0 %v620
    %649 = vmatprep.subr.bf16.mxu0 0
    %650 = vmatpush1.bf16.msra.mxu0 %v619
    %651 = vmatprep.subr.bf16.mxu0 0
    %652 = vmatpush2.bf16.msra.mxu0 0
    %653 = vmatprep.subr.bf16.mxu0 0
    %654 = vmatpush2.bf16.msra.mxu0 0
    %655 = vmatprep.subr.bf16.mxu0 0
    %656 = vmatpush2.bf16.msra.mxu0 0
    %657 = vmatprep.subr.bf16.mxu0 0
    %658 = vmatpush2.bf16.msra.mxu0 0
    %659 = vmatprep.subr.bf16.mxu0 0
    %660 = vmatpush2.bf16.msra.mxu0 0
    %661 = vmatprep.subr.bf16.mxu0 0
    %662 = vmatpush2.bf16.msra.mxu0 0
    %663 = vmatprep.subr.bf16.mxu0 0
    %664 = vmatpush2.bf16.msra.mxu0 0
    %665 = vmatprep.subr.bf16.mxu0 0
    %666 = vmatpush2.bf16.msra.mxu0 0
    %667 = vmatprep.mubr.bf16.mxu0 0
    %668 = vmatmul.mubr.bf16.gmra.mxu0 %v570
    %v669 = vpop.f32.mrf.mxu0
    %v670 = vadd.f32 %v522, %v669
    %v671 = vpop.f32.mrf.mxu0
    %v672 = vpop.f32.mrf.mxu0
    %v673 = vpop.f32.mrf.mxu0
    %674 = vdwg.mxu0
    %v675 = vld [vmem:[%s4 + $0x3] sm:$0x1]
    %v676 = vlaneseq
    %v677 = vshrl.u32 %v676, 7
    %v678 = vsub.s32 0, %v677
    %v679 = vrot.slane %v675, %v678
    %v680 = vadd.f32 %v670, %v679
    %v681 = vld [vmem:[%s4 + $0x7] sm:$0x1]
    %v682 = vld [vmem:[%s4 + $0x8] sm:$0x1]
    %v683 = vrot.slane %v680, 4
    %v684 = vadd.f32 %v680, %v683
    %v685 = vrot.slane %v684, 2
    %v686 = vadd.f32 %v684, %v685
    %v687 = vrot.slane %v686, 1
    %v688 = vadd.f32 %v686, %v687
    %v689 = vrcp.pop 8.0
    %v690 = vmul.f32 %v688, %v689
    %v691 = vsub.f32 %v680, %v690
    %v692 = vmul.f32 %v691, %v691
    %v693 = vrot.slane %v692, 4
    %v694 = vadd.f32 %v692, %v693
    %v695 = vrot.slane %v694, 2
    %v696 = vadd.f32 %v694, %v695
    %v697 = vrot.slane %v696, 1
    %v698 = vadd.f32 %v696, %v697
    %v699 = vmul.f32 %v698, %v689
    %v700 = vadd.f32 %v699, 1e-05
    %v701 = vrsqrt.pop %v700
    %v702 = vmul.f32 %v691, %v701
    %v703 = vlaneseq
    %v704 = vshrl.u32 %v703, 7
    %v705 = vsub.s32 0, %v704
    %v706 = vrot.slane %v681, %v705
    %v707 = vmul.f32 %v702, %v706
    %v708 = vlaneseq
    %v709 = vshrl.u32 %v708, 7
    %v710 = vsub.s32 0, %v709
    %v711 = vrot.slane %v682, %v710
    %v712 = vadd.f32 %v707, %v711
    %v713 = vmax.f32 %v712, 0.0
    %v714 = vpack.c.bf16 %v713, %v713
    %v715 = vld [vmem:[#allocation5 + $0x80] sm:$0xf]
    %v716 = vld [vmem:[#allocation5 + $0x84] sm:$0xf]
    %v717 = vld [vmem:[#allocation5 + $0x88] sm:$0xf]
    %v718 = vld [vmem:[#allocation5 + $0x8c] sm:$0xf]
    %v719 = vld [vmem:[#allocation5 + $0x90] sm:$0xf]
    %v720 = vld [vmem:[#allocation5 + $0x94] sm:$0xf]
    %v721 = vld [vmem:[#allocation5 + $0x98] sm:$0xf]
    %v722 = vld [vmem:[#allocation5 + $0x9c] sm:$0xf]
    %v723 = vld [vmem:[#allocation5 + $0xa0] sm:$0xf]
    %v724 = vld [vmem:[#allocation5 + $0xa4] sm:$0xf]
    %v725 = vld [vmem:[#allocation5 + $0xa8] sm:$0xf]
    %v726 = vld [vmem:[#allocation5 + $0xac] sm:$0xf]
    %v727 = vld [vmem:[#allocation5 + $0xb0] sm:$0xf]
    %v728 = vld [vmem:[#allocation5 + $0xb4] sm:$0xf]
    %v729 = vld [vmem:[#allocation5 + $0xb8] sm:$0xf]
    %v730 = vld [vmem:[#allocation5 + $0xbc] sm:$0xf]
    %v747 = vunpack.c.l.b16 %v715
    %v748 = vunpack.c.l.b16 %v716
    %v749 = vunpack.c.l.b16 %v717
    %v750 = vunpack.c.l.b16 %v718
    %v751 = vunpack.c.l.b16 %v719
    %v752 = vunpack.c.l.b16 %v720
    %v753 = vunpack.c.l.b16 %v721
    %v754 = vunpack.c.l.b16 %v722
    %v755 = vunpack.c.l.b16 %v723
    %v756 = vunpack.c.l.b16 %v724
    %v757 = vunpack.c.l.b16 %v725
    %v758 = vunpack.c.l.b16 %v726
    %v759 = vunpack.c.l.b16 %v727
    %v760 = vunpack.c.l.b16 %v728
    %v761 = vunpack.c.l.b16 %v729
    %v762 = vunpack.c.l.b16 %v730
    %v763 = vpack.c.b16 %v748, %v747
    %v764 = vpack.c.b16 %v750, %v749
    %v765 = vpack.c.b16 %v752, %v751
    %v766 = vpack.c.b16 %v754, %v753
    %v767 = vpack.c.b16 %v756, %v755
    %v768 = vpack.c.b16 %v758, %v757
    %v769 = vpack.c.b16 %v760, %v759
    %v770 = vpack.c.b16 %v762, %v761
    %779 = vmatprep.subr.bf16.mxu0 0
    %780 = vmatpush1.bf16.msra.mxu0 %v770
    %781 = vmatprep.subr.bf16.mxu0 0
    %782 = vmatpush1.bf16.msra.mxu0 %v769
    %783 = vmatprep.subr.bf16.mxu0 0
    %784 = vmatpush1.bf16.msra.mxu0 %v768
    %785 = vmatprep.subr.bf16.mxu0 0
    %786 = vmatpush1.bf16.msra.mxu0 %v767
    %787 = vmatprep.subr.bf16.mxu0 0
    %788 = vmatpush1.bf16.msra.mxu0 %v766
    %789 = vmatprep.subr.bf16.mxu0 0
    %790 = vmatpush1.bf16.msra.mxu0 %v765
    %791 = vmatprep.subr.bf16.mxu0 0
    %792 = vmatpush1.bf16.msra.mxu0 %v764
    %793 = vmatprep.subr.bf16.mxu0 0
    %794 = vmatpush1.bf16.msra.mxu0 %v763
    %795 = vmatprep.subr.bf16.mxu0 0
    %796 = vmatpush2.bf16.msra.mxu0 0
    %797 = vmatprep.subr.bf16.mxu0 0
    %798 = vmatpush2.bf16.msra.mxu0 0
    %799 = vmatprep.subr.bf16.mxu0 0
    %800 = vmatpush2.bf16.msra.mxu0 0
    %801 = vmatprep.subr.bf16.mxu0 0
    %802 = vmatpush2.bf16.msra.mxu0 0
    %803 = vmatprep.subr.bf16.mxu0 0
    %804 = vmatpush2.bf16.msra.mxu0 0
    %805 = vmatprep.subr.bf16.mxu0 0
    %806 = vmatpush2.bf16.msra.mxu0 0
    %807 = vmatprep.subr.bf16.mxu0 0
    %808 = vmatpush2.bf16.msra.mxu0 0
    %809 = vmatprep.subr.bf16.mxu0 0
    %810 = vmatpush2.bf16.msra.mxu0 0
    %811 = vmatprep.mubr.bf16.mxu0 0
    %812 = vmatmul.mubr.bf16.gmra.mxu0 %v714
    %v813 = vpop.f32.mrf.mxu0
    %v814 = vadd.f32 %v524, %v813
    %v815 = vpop.f32.mrf.mxu0
    %v816 = vpop.f32.mrf.mxu0
    %v817 = vpop.f32.mrf.mxu0
    %818 = vdwg.mxu0
    %v819 = vld [vmem:[%s4 + $0x4] sm:$0x1]
    %v820 = vlaneseq
    %v821 = vshrl.u32 %v820, 7
    %v822 = vsub.s32 0, %v821
    %v823 = vrot.slane %v819, %v822
    %v824 = vadd.f32 %v814, %v823
    %v825 = vld [vmem:[%s4 + $0x9] sm:$0x1]
    %v826 = vld [vmem:[%s4 + $0xa] sm:$0x1]
    %v827 = vrot.slane %v824, 4
    %v828 = vadd.f32 %v824, %v827
    %v829 = vrot.slane %v828, 2
    %v830 = vadd.f32 %v828, %v829
    %v831 = vrot.slane %v830, 1
    %v832 = vadd.f32 %v830, %v831
    %v833 = vmul.f32 %v832, %v689
    %v834 = vsub.f32 %v824, %v833
    %v835 = vmul.f32 %v834, %v834
    %v836 = vrot.slane %v835, 4
    %v837 = vadd.f32 %v835, %v836
    %v838 = vrot.slane %v837, 2
    %v839 = vadd.f32 %v837, %v838
    %v840 = vrot.slane %v839, 1
    %v841 = vadd.f32 %v839, %v840
    %v842 = vmul.f32 %v841, %v689
    %v843 = vadd.f32 %v842, 1e-05
    %v844 = vrsqrt.pop %v843
    %v845 = vmul.f32 %v834, %v844
    %v846 = vlaneseq
    %v847 = vshrl.u32 %v846, 7
    %v848 = vsub.s32 0, %v847
    %v849 = vrot.slane %v825, %v848
    %v850 = vmul.f32 %v845, %v849
    %v851 = vlaneseq
    %v852 = vshrl.u32 %v851, 7
    %v853 = vsub.s32 0, %v852
    %v854 = vrot.slane %v826, %v853
    %v855 = vadd.f32 %v850, %v854
    %v856 = vmax.f32 %v855, 0.0
    %v857 = vpack.c.bf16 %v856, %v856
    %v858 = vld [vmem:[#allocation5 + $0xc0] sm:$0xf]
    %v859 = vld [vmem:[#allocation5 + $0xc4] sm:$0xf]
    %v860 = vld [vmem:[#allocation5 + $0xc8] sm:$0xf]
    %v861 = vld [vmem:[#allocation5 + $0xcc] sm:$0xf]
    %v862 = vld [vmem:[#allocation5 + $0xd0] sm:$0xf]
    %v863 = vld [vmem:[#allocation5 + $0xd4] sm:$0xf]
    %v864 = vld [vmem:[#allocation5 + $0xd8] sm:$0xf]
    %v865 = vld [vmem:[#allocation5 + $0xdc] sm:$0xf]
    %v866 = vld [vmem:[#allocation5 + $0xe0] sm:$0xf]
    %v867 = vld [vmem:[#allocation5 + $0xe4] sm:$0xf]
    %v868 = vld [vmem:[#allocation5 + $0xe8] sm:$0xf]
    %v869 = vld [vmem:[#allocation5 + $0xec] sm:$0xf]
    %v870 = vld [vmem:[#allocation5 + $0xf0] sm:$0xf]
    %v871 = vld [vmem:[#allocation5 + $0xf4] sm:$0xf]
    %v872 = vld [vmem:[#allocation5 + $0xf8] sm:$0xf]
    %v873 = vld [vmem:[#allocation5 + $0xfc] sm:$0xf]
    %v890 = vunpack.c.l.b16 %v858
    %v891 = vunpack.c.l.b16 %v859
    %v892 = vunpack.c.l.b16 %v860
    %v893 = vunpack.c.l.b16 %v861
    %v894 = vunpack.c.l.b16 %v862
    %v895 = vunpack.c.l.b16 %v863
    %v896 = vunpack.c.l.b16 %v864
    %v897 = vunpack.c.l.b16 %v865
    %v898 = vunpack.c.l.b16 %v866
    %v899 = vunpack.c.l.b16 %v867
    %v900 = vunpack.c.l.b16 %v868
    %v901 = vunpack.c.l.b16 %v869
    %v902 = vunpack.c.l.b16 %v870
    %v903 = vunpack.c.l.b16 %v871
    %v904 = vunpack.c.l.b16 %v872
    %v905 = vunpack.c.l.b16 %v873
    %v906 = vpack.c.b16 %v891, %v890
    %v907 = vpack.c.b16 %v893, %v892
    %v908 = vpack.c.b16 %v895, %v894
    %v909 = vpack.c.b16 %v897, %v896
    %v910 = vpack.c.b16 %v899, %v898
    %v911 = vpack.c.b16 %v901, %v900
    %v912 = vpack.c.b16 %v903, %v902
    %v913 = vpack.c.b16 %v905, %v904
    %922 = vmatprep.subr.bf16.mxu0 0
    %923 = vmatpush1.bf16.msra.mxu0 %v913
    %924 = vmatprep.subr.bf16.mxu0 0
    %925 = vmatpush1.bf16.msra.mxu0 %v912
    %926 = vmatprep.subr.bf16.mxu0 0
    %927 = vmatpush1.bf16.msra.mxu0 %v911
    %928 = vmatprep.subr.bf16.mxu0 0
    %929 = vmatpush1.bf16.msra.mxu0 %v910
    %930 = vmatprep.subr.bf16.mxu0 0
    %931 = vmatpush1.bf16.msra.mxu0 %v909
    %932 = vmatprep.subr.bf16.mxu0 0
    %933 = vmatpush1.bf16.msra.mxu0 %v908
    %934 = vmatprep.subr.bf16.mxu0 0
    %935 = vmatpush1.bf16.msra.mxu0 %v907
    %936 = vmatprep.subr.bf16.mxu0 0
    %937 = vmatpush1.bf16.msra.mxu0 %v906
    %938 = vmatprep.subr.bf16.mxu0 0
    %939 = vmatpush2.bf16.msra.mxu0 0
    %940 = vmatprep.subr.bf16.mxu0 0
    %941 = vmatpush2.bf16.msra.mxu0 0
    %942 = vmatprep.subr.bf16.mxu0 0
    %943 = vmatpush2.bf16.msra.mxu0 0
    %944 = vmatprep.subr.bf16.mxu0 0
    %945 = vmatpush2.bf16.msra.mxu0 0
    %946 = vmatprep.subr.bf16.mxu0 0
    %947 = vmatpush2.bf16.msra.mxu0 0
    %948 = vmatprep.subr.bf16.mxu0 0
    %949 = vmatpush2.bf16.msra.mxu0 0
    %950 = vmatprep.subr.bf16.mxu0 0
    %951 = vmatpush2.bf16.msra.mxu0 0
    %952 = vmatprep.subr.bf16.mxu0 0
    %953 = vmatpush2.bf16.msra.mxu0 0
    %954 = vmatprep.mubr.bf16.mxu0 0
    %955 = vmatmul.mubr.bf16.gmra.mxu0 %v857
    %v956 = vpop.f32.mrf.mxu0
    %v957 = vadd.f32 %v563, %v956
    %v958 = vpop.f32.mrf.mxu0
    %v959 = vpop.f32.mrf.mxu0
    %v960 = vpop.f32.mrf.mxu0
    %961 = vdwg.mxu0
    %v962 = vld [vmem:[%s4 + $0x5] sm:$0x1]
    %v963 = vlaneseq
    %v964 = vshrl.u32 %v963, 7
    %v965 = vsub.s32 0, %v964
    %v966 = vrot.slane %v962, %v965
    %v967 = vadd.f32 %v957, %v966
    %v968 = vld [vmem:[%s4 + $0xb] sm:$0x1]
    %v969 = vld [vmem:[%s4 + $0xc] sm:$0x1]
    %v970 = vrot.slane %v967, 4
    %v971 = vadd.f32 %v967, %v970
    %v972 = vrot.slane %v971, 2
    %v973 = vadd.f32 %v971, %v972
    %v974 = vrot.slane %v973, 1
    %v975 = vadd.f32 %v973, %v974
    %v976 = vmul.f32 %v975, %v689
    %v977 = vsub.f32 %v967, %v976
    %v978 = vmul.f32 %v977, %v977
    %v979 = vrot.slane %v978, 4
    %v980 = vadd.f32 %v978, %v979
    %v981 = vrot.slane %v980, 2
    %v982 = vadd.f32 %v980, %v981
    %v983 = vrot.slane %v982, 1
    %v984 = vadd.f32 %v982, %v983
    %v985 = vmul.f32 %v984, %v689
    %v986 = vadd.f32 %v985, 1e-05
    %v987 = vrsqrt.pop %v986
    %v988 = vmul.f32 %v977, %v987
    %v989 = vlaneseq
    %v990 = vshrl.u32 %v989, 7
    %v991 = vsub.s32 0, %v990
    %v992 = vrot.slane %v968, %v991
    %v993 = vmul.f32 %v988, %v992
    %v994 = vlaneseq
    %v995 = vshrl.u32 %v994, 7
    %v996 = vsub.s32 0, %v995
    %v997 = vrot.slane %v969, %v996
    %v998 = vadd.f32 %v993, %v997
    %v999 = vmax.f32 %v998, 0.0
    %v1000 = vpack.c.bf16 %v999, %v999
    %v1001 = vld [vmem:[#allocation5 + $0x100] sm:$0xf]
    %v1002 = vld [vmem:[#allocation5 + $0x104] sm:$0xf]
    %v1003 = vld [vmem:[#allocation5 + $0x108] sm:$0xf]
    %v1004 = vld [vmem:[#allocation5 + $0x10c] sm:$0xf]
    %v1005 = vld [vmem:[#allocation5 + $0x110] sm:$0xf]
    %v1006 = vld [vmem:[#allocation5 + $0x114] sm:$0xf]
    %v1007 = vld [vmem:[#allocation5 + $0x118] sm:$0xf]
    %v1008 = vld [vmem:[#allocation5 + $0x11c] sm:$0xf]
    %v1009 = vld [vmem:[#allocation5 + $0x120] sm:$0xf]
    %v1010 = vld [vmem:[#allocation5 + $0x124] sm:$0xf]
    %v1011 = vld [vmem:[#allocation5 + $0x128] sm:$0xf]
    %v1012 = vld [vmem:[#allocation5 + $0x12c] sm:$0xf]
    %v1013 = vld [vmem:[#allocation5 + $0x130] sm:$0xf]
    %v1014 = vld [vmem:[#allocation5 + $0x134] sm:$0xf]
    %v1015 = vld [vmem:[#allocation5 + $0x138] sm:$0xf]
    %v1016 = vld [vmem:[#allocation5 + $0x13c] sm:$0xf]
    %v1033 = vunpack.c.l.b16 %v1001
    %v1034 = vunpack.c.l.b16 %v1002
    %v1035 = vunpack.c.l.b16 %v1003
    %v1036 = vunpack.c.l.b16 %v1004
    %v1037 = vunpack.c.l.b16 %v1005
    %v1038 = vunpack.c.l.b16 %v1006
    %v1039 = vunpack.c.l.b16 %v1007
    %v1040 = vunpack.c.l.b16 %v1008
    %v1041 = vunpack.c.l.b16 %v1009
    %v1042 = vunpack.c.l.b16 %v1010
    %v1043 = vunpack.c.l.b16 %v1011
    %v1044 = vunpack.c.l.b16 %v1012
    %v1045 = vunpack.c.l.b16 %v1013
    %v1046 = vunpack.c.l.b16 %v1014
    %v1047 = vunpack.c.l.b16 %v1015
    %v1048 = vunpack.c.l.b16 %v1016
    %v1049 = vpack.c.b16 %v1034, %v1033
    %v1050 = vpack.c.b16 %v1036, %v1035
    %v1051 = vpack.c.b16 %v1038, %v1037
    %v1052 = vpack.c.b16 %v1040, %v1039
    %v1053 = vpack.c.b16 %v1042, %v1041
    %v1054 = vpack.c.b16 %v1044, %v1043
    %v1055 = vpack.c.b16 %v1046, %v1045
    %v1056 = vpack.c.b16 %v1048, %v1047
    %1065 = vmatprep.subr.bf16.mxu0 0
    %1066 = vmatpush1.bf16.msra.mxu0 %v1056
    %1067 = vmatprep.subr.bf16.mxu0 0
    %1068 = vmatpush1.bf16.msra.mxu0 %v1055
    %1069 = vmatprep.subr.bf16.mxu0 0
    %1070 = vmatpush1.bf16.msra.mxu0 %v1054
    %1071 = vmatprep.subr.bf16.mxu0 0
    %1072 = vmatpush1.bf16.msra.mxu0 %v1053
    %1073 = vmatprep.subr.bf16.mxu0 0
    %1074 = vmatpush1.bf16.msra.mxu0 %v1052
    %1075 = vmatprep.subr.bf16.mxu0 0
    %1076 = vmatpush1.bf16.msra.mxu0 %v1051
    %1077 = vmatprep.subr.bf16.mxu0 0
    %1078 = vmatpush1.bf16.msra.mxu0 %v1050
    %1079 = vmatprep.subr.bf16.mxu0 0
    %1080 = vmatpush1.bf16.msra.mxu0 %v1049
    %1081 = vmatprep.subr.bf16.mxu0 0
    %1082 = vmatpush2.bf16.msra.mxu0 0
    %1083 = vmatprep.subr.bf16.mxu0 0
    %1084 = vmatpush2.bf16.msra.mxu0 0
    %1085 = vmatprep.subr.bf16.mxu0 0
    %1086 = vmatpush2.bf16.msra.mxu0 0
    %1087 = vmatprep.subr.bf16.mxu0 0
    %1088 = vmatpush2.bf16.msra.mxu0 0
    %1089 = vmatprep.subr.bf16.mxu0 0
    %1090 = vmatpush2.bf16.msra.mxu0 0
    %1091 = vmatprep.subr.bf16.mxu0 0
    %1092 = vmatpush2.bf16.msra.mxu0 0
    %1093 = vmatprep.subr.bf16.mxu0 0
    %1094 = vmatpush2.bf16.msra.mxu0 0
    %1095 = vmatprep.subr.bf16.mxu0 0
    %1096 = vmatpush2.bf16.msra.mxu0 0
    %1097 = vmatprep.mubr.bf16.mxu0 0
    %1098 = vmatmul.mubr.bf16.gmra.mxu0 %v1000
    %v1099 = vpop.f32.mrf.mxu0
    %v1100 = vadd.f32 %v565, %v1099
    %v1101 = vpop.f32.mrf.mxu0
    %v1102 = vpop.f32.mrf.mxu0
    %v1103 = vpop.f32.mrf.mxu0
    %1104 = vdwg.mxu0
    %v1105 = vld [vmem:[%s4 + $0x6] sm:$0x1]
    %v1106 = vlaneseq
    %v1107 = vshrl.u32 %v1106, 7
    %v1108 = vsub.s32 0, %v1107
    %v1109 = vrot.slane %v1105, %v1108
    %v1110 = vadd.f32 %v1100, %v1109
    %1111 = vst [vmem:[#allocation8] sm:$0xff] %v1110
    // Predicated region
    $region34: #{tpu_custom_call.1} parent=1 // pred_check
      _
    $region35: #{tpu_custom_call.1} parent=1 // pred_check_branch
      %1113 = sbr.rel (0) target = $region37
    $region36: #{tpu_custom_call.1} parent=1 // pred_region
      %s1115 = ssub.s32 128, 128
      %1116 = vsyncadd [#allocation4], %s1115
      %s1118 = sshll.u32 [#allocation8], 4
      %s1119 = int_to_ptr.vmem [resolvable:$true] %s1118
      %1121 = dma.vmem_to_hbm [thread:$0]  %s1119, 128, %s5, [#allocation4]
    $region37: #{tpu_custom_call.1} parent=1 // pred_fallthru
      _
    // Predicated region
    $region38: #{tpu_custom_call.1} parent=1 // pred_check
      _
    $region39: #{tpu_custom_call.1} parent=1 // pred_check_branch
      %1123 = sbr.rel (0) target = $region41
    $region40: #{tpu_custom_call.1} parent=1 // pred_region
      %1124 = dma.done [#allocation4], 128
    $region41: #{tpu_custom_call.1} parent=1 // pred_fallthru
      _
    %1125 = vsyncpa [#allocation3], 1
    %1126 = vsyncpa [#allocation6], 1
    %1127 = vsyncpa [#allocation4], 1

</llo_original>
